<compile_context>
chip_gen: v7x
topology: tpu7x:2x2x1
jax: 0.10.0
libtpu: 0.0.40
codegen_flags: <defaults>
</compile_context>

<pallas_src>
import functools

import jax
import jax.numpy as jnp
from jax.experimental import pallas as pl
from jax.experimental.pallas import tpu as pltpu


def _dyrelu_coefs_kernel(x_ref, w1t_ref, b1_ref, w2t_ref, b2_ref,
                         out_ref, acc_ref, *,
                         n_spatial, lane_slice, tail_valid, inv_hw):
    # x_ref:   (Bt, C, SW)  native-dtype spatial chunk (SW multiple of lane_slice)
    # w1t_ref: (C, hidden)  pre-transposed fc1 weight (f32)
    # b1_ref:  (1, hidden)
    # w2t_ref: (hidden, 2k) pre-transposed fc2 weight (f32)
    # b2_ref:  (1, 2k)
    # out_ref: (Bt, 1, 2k)
    # acc_ref: (Bt, C, lane_slice) f32 lane-parallel accumulator (persists
    #          across the spatial grid axis).
    # Static: n_spatial (spatial grid steps), lane_slice (VPU slice width,
    #         multiple of 128), tail_valid (valid lanes in LAST chunk),
    #         inv_hw (1 / (H*W)).
    s = pl.program_id(1)
    sw = x_ref.shape[2]
    n_slices = sw // lane_slice

    @pl.when(s == 0)
    def _init():
        acc_ref[...] = jnp.zeros_like(acc_ref)

    def accumulate(valid_lanes):
        # valid_lanes is a static Python int -> all masking resolves at trace
        # time; full-interior steps are pure vld + f32 VPU adds (no XLU).
        for j in range(n_slices):
            lo = j * lane_slice
            if lo >= valid_lanes:
                break                                     # slice fully OOB
            xs = x_ref[:, :, lo:lo + lane_slice].astype(jnp.float32)
            n_valid = valid_lanes - lo
            if n_valid < lane_slice:                      # ragged boundary slice
                lane = jax.lax.broadcasted_iota(jnp.int32, xs.shape, 2)
                xs = jnp.where(lane < n_valid, xs, 0.0)
            acc_ref[...] += xs

    if n_spatial == 1:
        accumulate(tail_valid)                            # single (maybe ragged) chunk
    elif tail_valid == sw:
        accumulate(sw)                                    # sw divides H*W exactly
    else:
        @pl.when(s < n_spatial - 1)
        def _steady():
            accumulate(sw)

        @pl.when(s == n_spatial - 1)
        def _tail():
            accumulate(tail_valid)

    @pl.when(s == n_spatial - 1)
    def _finalize():
        # One cross-lane reduce per batch tile, then the tiny FC epilogue.
        theta = jnp.sum(acc_ref[...], axis=-1) * inv_hw   # (Bt, C)  exact mean
        h = jnp.dot(theta, w1t_ref[...],
                    preferred_element_type=jnp.float32) + b1_ref[...]
        h = jnp.maximum(h, 0.0)                           # ReLU
        o = jnp.dot(h, w2t_ref[...],
                    preferred_element_type=jnp.float32) + b2_ref[...]
        # 2*sigmoid(o) - 1 == tanh(o/2)  (single EUP op)
        out_ref[...] = jnp.tanh(0.5 * o)[:, None, :]      # (Bt, 1, 2k)


def dyrelu_get_relu_coefs(x_nchw, w1, b1, w2, b2, *,
                          target_block_bytes=2 * 1024 * 1024):
    """DyReLU.get_relu_coefs (conv_type='2d') as a Pallas TPU kernel.

    x_nchw: [B, C, H, W], any float dtype (streamed natively, cast in-kernel).
    w1, b1, w2, b2: nn.Linear params: [hidden, C], [hidden], [2k, hidden], [2k].
    Returns theta: [B, 2k] float32.

    target_block_bytes: approximate x bytes moved per grid step (per pipeline
    buffer).  ~1-2 MiB keeps the mem-bound stream near the HBM roofline on
    v5e/v6e; v7x likes 2-4 MiB.  Total VMEM stays far below the 32 MiB scoped
    limit used here on all generations.
    """
    B, C, H, W = x_nchw.shape
    hw = H * W
    hidden = w1.shape[0]
    out_dim = w2.shape[0]

    # Stream x in its NATIVE dtype (bf16 inputs move half the HBM bytes); the
    # f32 cast happens inside the kernel.  Collapsing (H, W) is a free
    # metadata reshape -- no pad, no extra HBM pass.
    x_flat = x_nchw.reshape(B, C, hw)
    itemsize = x_flat.dtype.itemsize

    # --- spatial chunk width (lanes) ---------------------------------------
    lane_hw = pl.cdiv(hw, 128) * 128
    sw = min(lane_hw,
             max(128, (target_block_bytes // (C * itemsize)) // 128 * 128))
    # Accumulate in lane-parallel slices of at most 1024 lanes: a handful of
    # unrolled VPU adds per step, one cross-lane reduce in the epilogue.
    if sw > 1024:
        sw = (sw // 1024) * 1024
        lane_slice = 1024
    else:
        lane_slice = sw
    n_spatial = pl.cdiv(hw, sw)
    tail_valid = hw - (n_spatial - 1) * sw     # valid lanes in the last chunk

    # --- batch rows per step (block several rows when C*H*W is small) ------
    row_bytes = C * sw * itemsize
    bt_budget = max(1, min(B, target_block_bytes // max(1, row_bytes)))
    if B >= 2:
        # keep >= 2 batch tiles so the "parallel" axis covers both
        # TensorCores on v7x megacore parts.
        bt_budget = min(bt_budget, max(1, B // 2))
    bt = max(d for d in range(1, bt_budget + 1) if B % d == 0)
    n_batch = B // bt

    # Pre-transpose weights in the wrapper (free at trace time; avoids an
    # in-kernel XLU relayout).
    w1t = jnp.asarray(w1, jnp.float32).T                  # (C, hidden)
    w2t = jnp.asarray(w2, jnp.float32).T                  # (hidden, out_dim)
    b1_2d = jnp.asarray(b1, jnp.float32).reshape(1, hidden)
    b2_2d = jnp.asarray(b2, jnp.float32).reshape(1, out_dim)

    kernel = functools.partial(
        _dyrelu_coefs_kernel,
        n_spatial=n_spatial, lane_slice=lane_slice,
        tail_valid=tail_valid, inv_hw=1.0 / float(hw))

    out = pl.pallas_call(
        kernel,
        out_shape=jax.ShapeDtypeStruct((B, 1, out_dim), jnp.float32),
        grid=(n_batch, n_spatial),
        in_specs=[
            pl.BlockSpec((bt, C, sw), lambda b, s: (b, 0, s)),
            # Constant-index weight/bias blocks are fetched once.
            # (pipeline_mode=pl.Buffered(1) would shave one weight buffer at
            #  very large C; left at the default here.)
            pl.BlockSpec((C, hidden), lambda b, s: (0, 0)),
            pl.BlockSpec((1, hidden), lambda b, s: (0, 0)),
            pl.BlockSpec((hidden, out_dim), lambda b, s: (0, 0)),
            pl.BlockSpec((1, out_dim), lambda b, s: (0, 0)),
        ],
        out_specs=pl.BlockSpec((bt, 1, out_dim), lambda b, s: (b, 0, 0)),
        scratch_shapes=[pltpu.VMEM((bt, C, lane_slice), jnp.float32)],
        compiler_params=pltpu.CompilerParams(
            # batch tiles independent -> megacore-shardable on v7x; spatial
            # axis is a reduction over a revisited output block.
            dimension_semantics=("parallel", "arbitrary"),
            # v5e's scoped default is only 16 MiB; 32 MiB is safe on all
            # generations (v7x physical VMEM is 64 MiB).
            vmem_limit_bytes=32 * 1024 * 1024,
        ),
    )(x_flat, w1t, b1_2d, w2t, b2_2d)
    return out[:, 0, :]


def dyrelu_get_relu_coefs_ref(x_nchw, w1, b1, w2, b2):
    """Plain-JAX reference matching the PyTorch get_relu_coefs (conv_type='2d')."""
    theta = jnp.mean(x_nchw, axis=-1)
    theta = jnp.mean(theta, axis=-1)
    theta = jnp.maximum(theta @ w1.T + b1, 0.0)
    theta = theta @ w2.T + b2
    return 2.0 * jax.nn.sigmoid(theta) - 1.0


if __name__ == "__main__":
    # Module config consistent with DyReLU(channels=8, reduction=4, k=2, '2d')
    channels, reduction, k = 8, 4, 2
    hidden = channels // reduction          # fc1 output dim
    out_dim = 2 * k                         # fc2 output dim
    B, H, W = 2, 16, 16

    key = jax.random.PRNGKey(0)
    kx, k1, k2, k3, k4, kx2 = jax.random.split(key, 6)

    # Deterministic synthetic parameters (nn.Linear shapes: [out, in] + [out])
    x = jax.random.normal(kx, (B, channels, H, W), dtype=jnp.float32)
    w1 = jax.random.normal(k1, (hidden, channels), dtype=jnp.float32) * 0.1
    b1 = jax.random.normal(k2, (hidden,), dtype=jnp.float32) * 0.1
    w2 = jax.random.normal(k3, (out_dim, hidden), dtype=jnp.float32) * 0.1
    b2 = jax.random.normal(k4, (out_dim,), dtype=jnp.float32) * 0.1

    # Registered buffers from __init__ (unused: forward() is abstract).
    lambdas = jnp.array([1.0] * k + [0.5] * k, dtype=jnp.float32)
    init_v = jnp.array([1.0] + [0.0] * (2 * k - 1), dtype=jnp.float32)
    del lambdas, init_v

    theta_ref = dyrelu_get_relu_coefs_ref(x, w1, b1, w2, b2)

    # 1) Default tiling (single spatial chunk per batch tile at this toy size).
    theta = jax.block_until_ready(dyrelu_get_relu_coefs(x, w1, b1, w2, b2))
    assert theta.shape == (B, out_dim)
    assert jnp.allclose(theta, theta_ref, atol=1e-5, rtol=1e-5), \
        "Pallas kernel does not match JAX reference (default tiling)"

    # 2) Forced multi-chunk spatial reduction (accumulator revisit path).
    theta_mc = jax.block_until_ready(
        dyrelu_get_relu_coefs(x, w1, b1, w2, b2, target_block_bytes=4096))
    assert jnp.allclose(theta_mc, theta_ref, atol=1e-5, rtol=1e-5), \
        "Pallas kernel does not match JAX reference (multi-chunk)"

    # 3) Ragged spatial size: in-kernel lane masking, no wrapper pad.
    x_odd = jax.random.normal(kx2, (B, channels, 11, 13), dtype=jnp.float32)
    theta_odd_ref = dyrelu_get_relu_coefs_ref(x_odd, w1, b1, w2, b2)
    theta_odd = jax.block_until_ready(
        dyrelu_get_relu_coefs(x_odd, w1, b1, w2, b2))
    assert jnp.allclose(theta_odd, theta_odd_ref, atol=1e-5, rtol=1e-5), \
        "Pallas kernel does not match JAX reference (ragged, single chunk)"
    theta_odd_mc = jax.block_until_ready(
        dyrelu_get_relu_coefs(x_odd, w1, b1, w2, b2, target_block_bytes=4096))
    assert jnp.allclose(theta_odd_mc, theta_odd_ref, atol=1e-5, rtol=1e-5), \
        "Pallas kernel does not match JAX reference (ragged, multi-chunk)"

    # 4) Native bf16 streaming (in-kernel widening cast, f32 accumulation).
    x_bf16 = x.astype(jnp.bfloat16)
    theta_bf16_ref = dyrelu_get_relu_coefs_ref(
        x_bf16.astype(jnp.float32), w1, b1, w2, b2)
    theta_bf16 = jax.block_until_ready(
        dyrelu_get_relu_coefs(x_bf16, w1, b1, w2, b2))
    assert jnp.allclose(theta_bf16, theta_bf16_ref, atol=1e-4, rtol=1e-4), \
        "Pallas kernel does not match JAX reference (bf16 streaming)"

    print("KERNEL_OK")
</pallas_src>

<mosaic_0001>
module attributes {stable_mosaic.version = 11 : i64} {
  func.func @_dyrelu_coefs_kernel(%arg0: i32, %arg1: i32, %arg2: memref<1x8x256xf32, #tpu.memory_space<vmem>>, %arg3: memref<8x2xf32, #tpu.memory_space<vmem>>, %arg4: memref<1x2xf32, #tpu.memory_space<vmem>>, %arg5: memref<2x4xf32, #tpu.memory_space<vmem>>, %arg6: memref<1x4xf32, #tpu.memory_space<vmem>>, %arg7: memref<1x1x4xf32, #tpu.memory_space<vmem>>, %arg8: memref<1x8x256xf32, #tpu.memory_space<vmem>>) attributes {dimension_semantics = [#tpu.dimension_semantics<parallel>, #tpu.dimension_semantics<arbitrary>], iteration_bounds = array<i64: 2, 1>, scalar_prefetch = 0 : i64, scratch_operands = 1 : i64, tpu.core_type = #tpu.core_type<tc>, window_params = [{transform_indices = @transform_0, window_bounds = array<i64: 1, 8, 256>}, {pipeline_mode = #tpu.pipeline_mode<synchronous>, transform_indices = @transform_1, window_bounds = array<i64: 8, 2>}, {pipeline_mode = #tpu.pipeline_mode<synchronous>, transform_indices = @transform_2, window_bounds = array<i64: 1, 2>}, {pipeline_mode = #tpu.pipeline_mode<synchronous>, transform_indices = @transform_3, window_bounds = array<i64: 2, 4>}, {pipeline_mode = #tpu.pipeline_mode<synchronous>, transform_indices = @transform_4, window_bounds = array<i64: 1, 4>}, {transform_indices = @transform_5, window_bounds = array<i64: 1, 1, 4>}]} {
    %c0_i32 = arith.constant 0 : i32
    %0 = arith.cmpi eq, %arg1, %c0_i32 : i32
    %1 = arith.extui %0 : i1 to i32
    %c0_i32_0 = arith.constant 0 : i32
    %2 = arith.cmpi ne, %1, %c0_i32_0 : i32
    scf.if %2 {
      %cst = arith.constant 0.000000e+00 : f32
      %10 = vector.broadcast %cst : f32 to vector<1x8x256xf32>
      %c0_11 = arith.constant 0 : index
      %c0_12 = arith.constant 0 : index
      %c0_13 = arith.constant 0 : index
      %11 = vector.load %arg8[%c0_11, %c0_12, %c0_13] : memref<1x8x256xf32, #tpu.memory_space<vmem>>, vector<1x8x256xf32>
      tpu.vector_store %arg8[%c0_11, %c0_12, %c0_13], %10 {strides = array<i32>} : memref<1x8x256xf32, #tpu.memory_space<vmem>>, vector<1x8x256xf32>,
    } else {
    }
    %c0 = arith.constant 0 : index
    %c0_1 = arith.constant 0 : index
    %c0_2 = arith.constant 0 : index
    %3 = vector.load %arg2[%c0, %c0_1, %c0_2] : memref<1x8x256xf32, #tpu.memory_space<vmem>>, vector<1x8x256xf32>
    %c0_3 = arith.constant 0 : index
    %c0_4 = arith.constant 0 : index
    %c0_5 = arith.constant 0 : index
    %4 = vector.load %arg8[%c0_3, %c0_4, %c0_5] : memref<1x8x256xf32, #tpu.memory_space<vmem>>, vector<1x8x256xf32>
    %5 = arith.addf %4, %3 : vector<1x8x256xf32>
    %c0_6 = arith.constant 0 : index
    %c0_7 = arith.constant 0 : index
    %c0_8 = arith.constant 0 : index
    %6 = vector.load %arg8[%c0_6, %c0_7, %c0_8] : memref<1x8x256xf32, #tpu.memory_space<vmem>>, vector<1x8x256xf32>
    tpu.vector_store %arg8[%c0_6, %c0_7, %c0_8], %5 {strides = array<i32>} : memref<1x8x256xf32, #tpu.memory_space<vmem>>, vector<1x8x256xf32>,
    %c0_i32_9 = arith.constant 0 : i32
    %7 = arith.cmpi eq, %arg1, %c0_i32_9 : i32
    %8 = arith.extui %7 : i1 to i32
    %c0_i32_10 = arith.constant 0 : i32
    %9 = arith.cmpi ne, %8, %c0_i32_10 : i32
    scf.if %9 {
      %c0_11 = arith.constant 0 : index
      %c0_12 = arith.constant 0 : index
      %c0_13 = arith.constant 0 : index
      %10 = vector.load %arg8[%c0_11, %c0_12, %c0_13] : memref<1x8x256xf32, #tpu.memory_space<vmem>>, vector<1x8x256xf32>
      %cst = arith.constant dense<0.000000e+00> : vector<1x8xf32>
      %11 = vector.multi_reduction <add>, %10, %cst [2] : vector<1x8x256xf32> to vector<1x8xf32>
      %cst_14 = arith.constant 3.906250e-03 : f32
      %12 = vector.broadcast %cst_14 : f32 to vector<1x8xf32>
      %13 = arith.mulf %11, %12 : vector<1x8xf32>
      %c0_15 = arith.constant 0 : index
      %c0_16 = arith.constant 0 : index
      %14 = vector.load %arg3[%c0_15, %c0_16] : memref<8x2xf32, #tpu.memory_space<vmem>>, vector<8x2xf32>
      %cst_17 = arith.constant dense<0.000000e+00> : vector<1x2xf32>
      %15 = tpu.matmul %13, %14, %cst_17 {dimension_numbers = #tpu.dot_dimension_numbers<[1], [0], [0], [1], [0, 0, 1, 1], [], []>} : vector<1x8xf32>, vector<8x2xf32>, vector<1x2xf32> -> vector<1x2xf32>
      %c0_18 = arith.constant 0 : index
      %c0_19 = arith.constant 0 : index
      %16 = vector.load %arg4[%c0_18, %c0_19] : memref<1x2xf32, #tpu.memory_space<vmem>>, vector<1x2xf32>
      %17 = arith.addf %15, %16 : vector<1x2xf32>
      %cst_20 = arith.constant 0.000000e+00 : f32
      %18 = vector.broadcast %cst_20 : f32 to vector<1x2xf32>
      %19 = arith.maximumf %17, %18 : vector<1x2xf32>
      %c0_21 = arith.constant 0 : index
      %c0_22 = arith.constant 0 : index
      %20 = vector.load %arg5[%c0_21, %c0_22] : memref<2x4xf32, #tpu.memory_space<vmem>>, vector<2x4xf32>
      %cst_23 = arith.constant dense<0.000000e+00> : vector<1x4xf32>
      %21 = tpu.matmul %19, %20, %cst_23 {dimension_numbers = #tpu.dot_dimension_numbers<[1], [0], [0], [1], [0, 0, 1, 1], [], []>} : vector<1x2xf32>, vector<2x4xf32>, vector<1x4xf32> -> vector<1x4xf32>
      %c0_24 = arith.constant 0 : index
      %c0_25 = arith.constant 0 : index
      %22 = vector.load %arg6[%c0_24, %c0_25] : memref<1x4xf32, #tpu.memory_space<vmem>>, vector<1x4xf32>
      %23 = arith.addf %21, %22 : vector<1x4xf32>
      %cst_26 = arith.constant 5.000000e-01 : f32
      %24 = vector.broadcast %cst_26 : f32 to vector<1x4xf32>
      %25 = arith.mulf %24, %23 : vector<1x4xf32>
      %26 = math.tanh %25 : vector<1x4xf32>
      %27 = vector.shape_cast %26 : vector<1x4xf32> to vector<1x1x4xf32>
      %c0_27 = arith.constant 0 : index
      %c0_28 = arith.constant 0 : index
      %c0_29 = arith.constant 0 : index
      %28 = vector.load %arg7[%c0_27, %c0_28, %c0_29] : memref<1x1x4xf32, #tpu.memory_space<vmem>>, vector<1x1x4xf32>
      tpu.vector_store %arg7[%c0_27, %c0_28, %c0_29], %27 {strides = array<i32>} : memref<1x1x4xf32, #tpu.memory_space<vmem>>, vector<1x1x4xf32>,
    } else {
    }
    return
  }
  func.func @transform_0(%arg0: i32, %arg1: i32) -> (i32, i32, i32) {
    %c0_i32 = arith.constant 0 : i32
    %c0_i32_0 = arith.constant 0 : i32
    return %arg0, %c0_i32, %arg1 : i32, i32, i32
  }
  func.func @transform_1(%arg0: i32, %arg1: i32) -> (i32, i32) {
    %c0_i32 = arith.constant 0 : i32
    %c0_i32_0 = arith.constant 0 : i32
    %c0_i32_1 = arith.constant 0 : i32
    return %c0_i32, %c0_i32_0 : i32, i32
  }
  func.func @transform_2(%arg0: i32, %arg1: i32) -> (i32, i32) {
    %c0_i32 = arith.constant 0 : i32
    %c0_i32_0 = arith.constant 0 : i32
    %c0_i32_1 = arith.constant 0 : i32
    return %c0_i32, %c0_i32_0 : i32, i32
  }
  func.func @transform_3(%arg0: i32, %arg1: i32) -> (i32, i32) {
    %c0_i32 = arith.constant 0 : i32
    %c0_i32_0 = arith.constant 0 : i32
    %c0_i32_1 = arith.constant 0 : i32
    return %c0_i32, %c0_i32_0 : i32, i32
  }
  func.func @transform_4(%arg0: i32, %arg1: i32) -> (i32, i32) {
    %c0_i32 = arith.constant 0 : i32
    %c0_i32_0 = arith.constant 0 : i32
    %c0_i32_1 = arith.constant 0 : i32
    return %c0_i32, %c0_i32_0 : i32, i32
  }
  func.func @transform_5(%arg0: i32, %arg1: i32) -> (i32, i32, i32) {
    %c0_i32 = arith.constant 0 : i32
    %c0_i32_0 = arith.constant 0 : i32
    %c0_i32_1 = arith.constant 0 : i32
    return %arg0, %c0_i32, %c0_i32_0 : i32, i32, i32
  }
}

</mosaic_0001>

<llo_original>
// kernel: tpu_custom_call.1
$region0: #{tpu_custom_call.1}
  #allocation0 [shape = 'u32[]', space=smem, size = 0x4, offset = 0x4, fixed_abs, tag = 'smem constant byte address 0x4 - core index']
  #allocation1 [shape = 'u32[144,128]{1,0:T(1,128)}', space=vmem, size = 0x12000, scoped, tag = 'internal scratch']
  #allocation2 [shape = 'f32[1,8,256]{2,1,0:T(8,128)}', space=vmem, size = 0x2000, scoped, tag = 'scratch operand']
  %s0 = inlined_call_operand.hbm [shape: f32[2,8,256], index: 0, kind: input, shape index: {}]
  %s1 = inlined_call_operand.vmem [shape: f32[8,2], index: 1, kind: input, shape index: {}]
  %s2 = inlined_call_operand.vmem [shape: f32[1,2], index: 2, kind: input, shape index: {}]
  %s3 = inlined_call_operand.vmem [shape: f32[2,4], index: 3, kind: input, shape index: {}]
  %s4 = inlined_call_operand.vmem [shape: f32[1,4], index: 4, kind: input, shape index: {}]
  %s5 = inlined_call_operand.hbm [shape: f32[2,1,4], index: 5, kind: output, shape index: {}]
  %s6 = sld [smem:[#allocation0]]
  $region65: #{tpu_custom_call.1} parent=0
    _
  %s8 = ssub.s32 1, %s6
  %s9 = scalar_select 0, %s8, %s6
  $region1: #{tpu_custom_call.1} parent=0
    #allocation3 [shape = 'u8[16384]{0}', space=vmem, size = 0x4000, scoped, tag = 'input window, operand 0']
    #allocation4 [shape = 's32[2]{0}', space=sflag, size = 0x8, scoped, tag = 'scoped memory for tpu_custom_call.1']
    #allocation5 [shape = 's32[2]{0}', space=sflag, size = 0x8, scoped, tag = 'scoped memory for tpu_custom_call.1']
    #allocation6 [shape = 'u8[1024]{0}', space=vmem, size = 0x400, scoped, tag = 'output window, operand 0']
    %10 = vsyncpa [#allocation4], 0
    %s11 = scalar_lea.sflag [#allocation4], 1
    %12 = vsyncpa %s11, 0
    %13 = vsyncpa [#allocation5], 0
    %s14 = scalar_lea.sflag [#allocation5], 1
    %15 = vsyncpa %s14, 0
    loop: start=0, step=1, limit=4
    $region2: #{tpu_custom_call.1} parent=1 // loop_pre_header
      _
    $region3: #{tpu_custom_call.1} parent=1 // loop_header
      %s17 = sphi 0, %s21
      %p18 = scmp.ge.s32.totalorder %s17, 4
      %s24 = sphi 0, %s36
      %s25 = sphi 0, %s32
      %s26 = sphi 0, %s24
      %s27 = sphi 0, %s25
      %s28 = sphi 0, %s26
      %s29 = sphi 0, %s27
      %s41 = sphi 0, %s43
      %s44 = sphi 0, %s41
      %s45 = sphi 0, %s44
      %s61 = sphi 0, %s45
      %s65 = sphi 0, %s65
      %s67 = sphi 0, %s65
      %s68 = sphi 0, %s67
      %s82 = sphi 0, %s68
      %s86 = sphi 0, %s86
      %s88 = sphi 0, %s86
      %s89 = sphi 0, %s88
      %s103 = sphi 0, %s89
      %s107 = sphi 0, %s107
      %s109 = sphi 0, %s107
      %s110 = sphi 0, %s109
      %s124 = sphi 0, %s110
      %s128 = sphi 0, %s128
      %s130 = sphi 0, %s128
      %s131 = sphi 0, %s130
      %s145 = sphi 0, %s131
      %s151 = sphi 0, %s153
      %s154 = sphi 0, %s151
      %s155 = sphi 0, %s154
      %s171 = sphi 0, %s155
    $region4: #{tpu_custom_call.1} parent=1 // loop_header_branch
      %20 = sbr.rel (%p18) target = $region8
    $region5: #{tpu_custom_call.1} parent=1 // loop_body
      %s22 = ssub.s32 %s17, 1
      %s23 = ssub.s32 %s17, 2
      %s30 = sadd.s32 1, %s25
      %p31 = scmp.ge.s32.totalorder %s30, 1
      %s32 = scalar_select %p31, 0, %s30
      %s33 = sadd.s32 1, %s24
      %s34 = scalar_select %p31, %s33, %s24
      %p35 = scmp.ge.s32.totalorder %s34, 2
      %s36 = scalar_select %p35, 0, %s34
      %s37 = ssub.s32 %s24, %s36
      %s38 = ssub.s32 %s25, %s32
      %s39 = sor.u32 %s37, %s38
      %p40 = scmp.eq.s32.totalorder %s39, 0
      %s42 = sadd.s32 %s41, 1
      %s43 = scalar_select %p40, %s41, %s42
      %p46 = pneg %p40
      %p47 = scmp.eq.s32.totalorder %s17, 1
      %p48 = por %p46, %p47
      %p49 = scmp.ne.s32.totalorder %s41, %s44
      %p50 = scmp.eq.s32.totalorder %s17, 0
      %p51 = por %p49, %p50
      %p52 = scmp.ne.s32.totalorder %s41, %s44
      %p53 = scmp.eq.s32.totalorder %s22, 1
      %p54 = por %p52, %p53
      %p55 = scmp.ne.s32.totalorder %s44, %s45
      %p56 = scmp.eq.s32.totalorder %s22, 0
      %p57 = por %p55, %p56
      %p58 = scmp.ne.s32.totalorder %s44, %s45
      %p59 = scmp.eq.s32.totalorder %s23, 1
      %p60 = por %p58, %p59
      %p62 = scmp.ne.s32.totalorder %s45, %s61
      %p63 = scmp.eq.s32.totalorder %s23, 0
      %p64 = por %p62, %p63
      %s66 = sadd.s32 %s65, 1
      %p69 = scmp.eq.s32.totalorder %s17, 1
      %p70 = scmp.ne.s32.totalorder %s65, %s67
      %p71 = scmp.eq.s32.totalorder %s17, 0
      %p72 = por %p70, %p71
      %p73 = scmp.ne.s32.totalorder %s65, %s67
      %p74 = scmp.eq.s32.totalorder %s22, 1
      %p75 = por %p73, %p74
      %p76 = scmp.ne.s32.totalorder %s67, %s68
      %p77 = scmp.eq.s32.totalorder %s22, 0
      %p78 = por %p76, %p77
      %p79 = scmp.ne.s32.totalorder %s67, %s68
      %p80 = scmp.eq.s32.totalorder %s23, 1
      %p81 = por %p79, %p80
      %p83 = scmp.ne.s32.totalorder %s68, %s82
      %p84 = scmp.eq.s32.totalorder %s23, 0
      %p85 = por %p83, %p84
      %s87 = sadd.s32 %s86, 1
      %p90 = scmp.eq.s32.totalorder %s17, 1
      %p91 = scmp.ne.s32.totalorder %s86, %s88
      %p92 = scmp.eq.s32.totalorder %s17, 0
      %p93 = por %p91, %p92
      %p94 = scmp.ne.s32.totalorder %s86, %s88
      %p95 = scmp.eq.s32.totalorder %s22, 1
      %p96 = por %p94, %p95
      %p97 = scmp.ne.s32.totalorder %s88, %s89
      %p98 = scmp.eq.s32.totalorder %s22, 0
      %p99 = por %p97, %p98
      %p100 = scmp.ne.s32.totalorder %s88, %s89
      %p101 = scmp.eq.s32.totalorder %s23, 1
      %p102 = por %p100, %p101
      %p104 = scmp.ne.s32.totalorder %s89, %s103
      %p105 = scmp.eq.s32.totalorder %s23, 0
      %p106 = por %p104, %p105
      %s108 = sadd.s32 %s107, 1
      %p111 = scmp.eq.s32.totalorder %s17, 1
      %p112 = scmp.ne.s32.totalorder %s107, %s109
      %p113 = scmp.eq.s32.totalorder %s17, 0
      %p114 = por %p112, %p113
      %p115 = scmp.ne.s32.totalorder %s107, %s109
      %p116 = scmp.eq.s32.totalorder %s22, 1
      %p117 = por %p115, %p116
      %p118 = scmp.ne.s32.totalorder %s109, %s110
      %p119 = scmp.eq.s32.totalorder %s22, 0
      %p120 = por %p118, %p119
      %p121 = scmp.ne.s32.totalorder %s109, %s110
      %p122 = scmp.eq.s32.totalorder %s23, 1
      %p123 = por %p121, %p122
      %p125 = scmp.ne.s32.totalorder %s110, %s124
      %p126 = scmp.eq.s32.totalorder %s23, 0
      %p127 = por %p125, %p126
      %s129 = sadd.s32 %s128, 1
      %p132 = scmp.eq.s32.totalorder %s17, 1
      %p133 = scmp.ne.s32.totalorder %s128, %s130
      %p134 = scmp.eq.s32.totalorder %s17, 0
      %p135 = por %p133, %p134
      %p136 = scmp.ne.s32.totalorder %s128, %s130
      %p137 = scmp.eq.s32.totalorder %s22, 1
      %p138 = por %p136, %p137
      %p139 = scmp.ne.s32.totalorder %s130, %s131
      %p140 = scmp.eq.s32.totalorder %s22, 0
      %p141 = por %p139, %p140
      %p142 = scmp.ne.s32.totalorder %s130, %s131
      %p143 = scmp.eq.s32.totalorder %s23, 1
      %p144 = por %p142, %p143
      %p146 = scmp.ne.s32.totalorder %s131, %s145
      %p147 = scmp.eq.s32.totalorder %s23, 0
      %p148 = por %p146, %p147
      %s149 = ssub.s32 %s24, %s36
      %p150 = scmp.eq.s32.totalorder %s149, 0
      %s152 = sadd.s32 %s151, 1
      %s153 = scalar_select %p150, %s151, %s152
      %p156 = pneg %p150
      %p157 = scmp.eq.s32.totalorder %s17, 1
      %p158 = por %p156, %p157
      %p159 = scmp.ne.s32.totalorder %s151, %s154
      %p160 = scmp.eq.s32.totalorder %s17, 0
      %p161 = por %p159, %p160
      %p162 = scmp.ne.s32.totalorder %s151, %s154
      %p163 = scmp.eq.s32.totalorder %s22, 1
      %p164 = por %p162, %p163
      %p165 = scmp.ne.s32.totalorder %s154, %s155
      %p166 = scmp.eq.s32.totalorder %s22, 0
      %p167 = por %p165, %p166
      %p168 = scmp.ne.s32.totalorder %s154, %s155
      %p169 = scmp.eq.s32.totalorder %s23, 1
      %p170 = por %p168, %p169
      %p172 = scmp.ne.s32.totalorder %s155, %s171
      %p173 = scmp.eq.s32.totalorder %s23, 0
      %p174 = por %p172, %p173
      %p175 = scmp.le.s32.totalorder 1, %s17
      %p176 = scmp.lt.s32.totalorder %s17, 3
      %p177 = pnand %p175, %p176
      %p178 = pneg %p177
      // Predicated region
      $region9: #{tpu_custom_call.1} parent=5 // pred_check
        _
      $region10: #{tpu_custom_call.1} parent=5 // pred_check_branch
        %180 = sbr.rel (%p177) target = $region12
      $region11: #{tpu_custom_call.1} parent=5 // pred_region
        %s181 = ssub.s32 %s17, 1
        // Predicated region
        $region13: #{tpu_custom_call.1} parent=11 // pred_check
          %p182 = pneg %p78
        $region14: #{tpu_custom_call.1} parent=11 // pred_check_branch
          %184 = sbr.rel (%p182) target = $region16
        $region15: #{tpu_custom_call.1} parent=11 // pred_region
          _
        $region16: #{tpu_custom_call.1} parent=11 // pred_fallthru
          _
        // Predicated region
        $region17: #{tpu_custom_call.1} parent=11 // pred_check
          %p185 = pneg %p99
        $region18: #{tpu_custom_call.1} parent=11 // pred_check_branch
          %187 = sbr.rel (%p185) target = $region20
        $region19: #{tpu_custom_call.1} parent=11 // pred_region
          _
        $region20: #{tpu_custom_call.1} parent=11 // pred_fallthru
          _
        // Predicated region
        $region21: #{tpu_custom_call.1} parent=11 // pred_check
          %p188 = pneg %p120
        $region22: #{tpu_custom_call.1} parent=11 // pred_check_branch
          %190 = sbr.rel (%p188) target = $region24
        $region23: #{tpu_custom_call.1} parent=11 // pred_region
          _
        $region24: #{tpu_custom_call.1} parent=11 // pred_fallthru
          _
        // Predicated region
        $region25: #{tpu_custom_call.1} parent=11 // pred_check
          %p191 = pneg %p141
        $region26: #{tpu_custom_call.1} parent=11 // pred_check_branch
          %193 = sbr.rel (%p191) target = $region28
        $region27: #{tpu_custom_call.1} parent=11 // pred_region
          _
        $region28: #{tpu_custom_call.1} parent=11 // pred_fallthru
          _
      $region12: #{tpu_custom_call.1} parent=5 // pred_fallthru
        _
      %p194 = scmp.lt.s32.totalorder %s17, 2
      // Predicated region
      $region29: #{tpu_custom_call.1} parent=5 // pred_check
        %p195 = pneg %p194
      $region30: #{tpu_custom_call.1} parent=5 // pred_check_branch
        %197 = sbr.rel (%p195) target = $region32
      $region31: #{tpu_custom_call.1} parent=5 // pred_region
        // Predicated region
        $region33: #{tpu_custom_call.1} parent=31 // pred_check
          %p198 = pneg %p51
        $region34: #{tpu_custom_call.1} parent=31 // pred_check_branch
          %200 = sbr.rel (%p198) target = $region36
        $region35: #{tpu_custom_call.1} parent=31 // pred_region
          %s201 = sand.u32 %s41, 1
          %s202 = scalar_lea.sflag [#allocation4], %s201
          %s203 = sand.u32 %s41, 1
          %s204 = smul.addr %s203, 16
          %s205 = scalar_lea.vmem [#allocation3], %s204
          %s206 = smul.u32 2, %s25
          %s208 = ssub.s32 256, 256
          %209 = vsyncadd %s202, %s208
          %s210 = smul.addr %s24, 2
          %s211 = sadd.s32 %s206, %s210
          %s212 = smul.addr %s211, 128
          %s213 = scalar_lea.hbm %s0, %s212
          %s215 = sshll.u32 %s205, 4
          %s216 = int_to_ptr.vmem [resolvable:$true] %s215
          %218 = dma.hbm_to_vmem [thread:$0]  %s213, 256, %s216, %s202
        $region36: #{tpu_custom_call.1} parent=31 // pred_fallthru
          _
      $region32: #{tpu_custom_call.1} parent=5 // pred_fallthru
        _
      %p219 = scmp.le.s32.totalorder 1, %s17
      %p220 = scmp.lt.s32.totalorder %s17, 3
      %p221 = pnand %p219, %p220
      %p222 = pneg %p221
      // Predicated region
      $region37: #{tpu_custom_call.1} parent=5 // pred_check
        _
      $region38: #{tpu_custom_call.1} parent=5 // pred_check_branch
        %224 = sbr.rel (%p221) target = $region40
      $region39: #{tpu_custom_call.1} parent=5 // pred_region
        %s225 = ssub.s32 %s17, 1
        %s226 = sand.u32 %s44, 1
        %s227 = scalar_lea.sflag [#allocation4], %s226
        %s228 = sand.u32 %s44, 1
        %s229 = smul.addr %s228, 16
        %s230 = scalar_lea.vmem [#allocation3], %s229
        // Predicated region
        $region41: #{tpu_custom_call.1} parent=39 // pred_check
          %p231 = pneg %p57
        $region42: #{tpu_custom_call.1} parent=39 // pred_check_branch
          %233 = sbr.rel (%p231) target = $region44
        $region43: #{tpu_custom_call.1} parent=39 // pred_region
          %234 = dma.done %s227, 256
        $region44: #{tpu_custom_call.1} parent=39 // pred_fallthru
          _
        %s235 = sand.u32 %s44, 1
        %s236 = scalar_lea.sflag [#allocation4], %s235
        %s237 = sand.u32 %s44, 1
        %s238 = smul.addr %s237, 16
        %s239 = scalar_lea.vmem [#allocation3], %s238
        %p240 = pneg %p57
        %p241 = pneg %p54
        %p242 = pneg %p78
        %p243 = pneg %p75
        %p244 = pneg %p99
        %p245 = pneg %p96
        %p246 = pneg %p120
        %p247 = pneg %p117
        %p248 = pneg %p141
        %p249 = pneg %p138
        %p250 = pneg %p167
        %p251 = pneg %p164
        %s252 = sand.u32 %s154, 1
        %s253 = scalar_lea.sflag [#allocation5], %s252
        %s254 = sand.u32 %s154, 1
        %s255 = scalar_lea.vmem [#allocation6], %s254
        %s256 = smul.u32 2, %s27
        %p257 = scmp.eq.s32.totalorder %s27, 0
        // Predicated region
        $region45: #{tpu_custom_call.1} parent=39 // pred_check
          %p258 = pneg %p257
        $region46: #{tpu_custom_call.1} parent=39 // pred_check_branch
          %260 = sbr.rel (%p258) target = $region48
        $region47: #{tpu_custom_call.1} parent=39 // pred_region
          %261 = vst [vmem:[#allocation2] sm:$0xff] 0.0
          %262 = vst [vmem:[#allocation2 + $0x8] sm:$0xff] 0.0
        $region48: #{tpu_custom_call.1} parent=39 // pred_fallthru
          _
        %v263 = vld [vmem:[%s230] sm:$0xff]
        %v264 = vld [vmem:[%s230 + $0x8] sm:$0xff]
        %v265 = vld [vmem:[#allocation2] sm:$0xff]
        %v266 = vld [vmem:[#allocation2 + $0x8] sm:$0xff]
        %v267 = vadd.f32 %v265, %v263
        %v268 = vadd.f32 %v266, %v264
        %269 = vst [vmem:[#allocation2] sm:$0xff] %v267
        %270 = vst [vmem:[#allocation2 + $0x8] sm:$0xff] %v268
        // Predicated region
        $region49: #{tpu_custom_call.1} parent=39 // pred_check
          %p271 = pneg %p257
        $region50: #{tpu_custom_call.1} parent=39 // pred_check_branch
          %273 = sbr.rel (%p271) target = $region52
        $region51: #{tpu_custom_call.1} parent=39 // pred_region
          %v274 = vld [vmem:[#allocation2] sm:$0xff]
          %v275 = vld [vmem:[#allocation2 + $0x8] sm:$0xff]
          %v276 = vadd.f32 %v274, %v275
          %277 = vadd.xlane.f32.xlu0 %v276
          %v278 = vpop.xlane.xlu0 %277
          %v279 = vmul.f32 %v278, 0.00390625
          %v280 = vld [vmem:[%s1] sm:$0xff]
          %v281 = vld [vmem:[%s2] sm:$0x1]
          %v283 = vlaneseq
          %v284 = vand.u32 %v283, 127
          %v285 = vlaneseq
          %v286 = vshrl.u32 %v285, 7
          %v287 = vsub.s32 %v284, %v286
          %v288 = vrot.slane %v279, %v287
          %vm289 = vcmask 64512
          %v290 = vsel %vm289, %v288, 0
          %292 = vmatprep.subr.mxu0 0.0
          %293 = vmatpush1.msra.mxu0 %v280
          %294 = vmatprep.subr.mxu0 0.0
          %295 = vmatpush1.msra.mxu0 0.0
          %296 = vmatprep.subr.mxu0 0.0
          %297 = vmatpush1.msra.mxu0 0.0
          %298 = vmatprep.subr.mxu0 0.0
          %299 = vmatpush1.msra.mxu0 0.0
          %300 = vmatprep.subr.mxu0 0.0
          %301 = vmatpush1.msra.mxu0 0.0
          %302 = vmatprep.subr.mxu0 0.0
          %303 = vmatpush1.msra.mxu0 0.0
          %304 = vmatprep.subr.mxu0 0.0
          %305 = vmatpush1.msra.mxu0 0.0
          %306 = vmatprep.subr.mxu0 0.0
          %307 = vmatpush1.msra.mxu0 0.0
          %308 = vmatprep.subr.mxu0 0.0
          %309 = vmatpush1.msra.mxu0 0.0
          %310 = vmatprep.subr.mxu0 0.0
          %311 = vmatpush1.msra.mxu0 0.0
          %312 = vmatprep.subr.mxu0 0.0
          %313 = vmatpush1.msra.mxu0 0.0
          %314 = vmatprep.subr.mxu0 0.0
          %315 = vmatpush1.msra.mxu0 0.0
          %316 = vmatprep.subr.mxu0 0.0
          %317 = vmatpush1.msra.mxu0 0.0
          %318 = vmatprep.subr.mxu0 0.0
          %319 = vmatpush1.msra.mxu0 0.0
          %320 = vmatprep.subr.mxu0 0.0
          %321 = vmatpush1.msra.mxu0 0.0
          %322 = vmatprep.subr.mxu0 0.0
          %323 = vmatpush1.msra.mxu0 0.0
          %324 = vmatprep.subr.mxu0 0.0
          %325 = vmatpush1.msra.mxu0 0.0
          %326 = vmatprep.subr.mxu0 0.0
          %327 = vmatpush1.msra.mxu0 0.0
          %328 = vmatprep.subr.mxu0 0.0
          %329 = vmatpush1.msra.mxu0 0.0
          %330 = vmatprep.subr.mxu0 0.0
          %331 = vmatpush1.msra.mxu0 0.0
          %332 = vmatprep.subr.mxu0 0.0
          %333 = vmatpush1.msra.mxu0 0.0
          %334 = vmatprep.subr.mxu0 0.0
          %335 = vmatpush1.msra.mxu0 0.0
          %336 = vmatprep.subr.mxu0 0.0
          %337 = vmatpush1.msra.mxu0 0.0
          %338 = vmatprep.subr.mxu0 0.0
          %339 = vmatpush1.msra.mxu0 0.0
          %340 = vmatprep.subr.mxu0 0.0
          %341 = vmatpush1.msra.mxu0 0.0
          %342 = vmatprep.subr.mxu0 0.0
          %343 = vmatpush1.msra.mxu0 0.0
          %344 = vmatprep.subr.mxu0 0.0
          %345 = vmatpush1.msra.mxu0 0.0
          %346 = vmatprep.subr.mxu0 0.0
          %347 = vmatpush1.msra.mxu0 0.0
          %348 = vmatprep.subr.mxu0 0.0
          %349 = vmatpush1.msra.mxu0 0.0
          %350 = vmatprep.subr.mxu0 0.0
          %351 = vmatpush1.msra.mxu0 0.0
          %352 = vmatprep.subr.mxu0 0.0
          %353 = vmatpush1.msra.mxu0 0.0
          %354 = vmatprep.subr.mxu0 0.0
          %355 = vmatpush1.msra.mxu0 0.0
          %356 = vmatprep.mubr.f32.mxu0 0.0
          %357 = vmatmul.mubr.f32.gmra.mrb[0].mxu0 %v290
          %v358 = vpop.f32.mrb[0].mxu0
          %v359 = vadd.f32 %v281, %v358
          %v360 = vpop.f32.mrb[0].mxu0
          %361 = vdwg.mxu0
          %v362 = vmax.f32 %v359, 0.0
          %v363 = vld [vmem:[%s3] sm:$0x3]
          %v364 = vld [vmem:[%s4] sm:$0x1]
          %vm365 = vcmask 15360
          %v367 = vsel %vm365, %v362, 0
          %vm369 = vcmask 1041408
          %v371 = vsel %vm369, %v363, 0
          %373 = vmatprep.subr.mxu0 0.0
          %374 = vmatpush1.msra.mxu0 %v371
          %375 = vmatprep.subr.mxu0 0.0
          %376 = vmatpush1.msra.mxu0 0.0
          %377 = vmatprep.subr.mxu0 0.0
          %378 = vmatpush1.msra.mxu0 0.0
          %379 = vmatprep.subr.mxu0 0.0
          %380 = vmatpush1.msra.mxu0 0.0
          %381 = vmatprep.subr.mxu0 0.0
          %382 = vmatpush1.msra.mxu0 0.0
          %383 = vmatprep.subr.mxu0 0.0
          %384 = vmatpush1.msra.mxu0 0.0
          %385 = vmatprep.subr.mxu0 0.0
          %386 = vmatpush1.msra.mxu0 0.0
          %387 = vmatprep.subr.mxu0 0.0
          %388 = vmatpush1.msra.mxu0 0.0
          %389 = vmatprep.subr.mxu0 0.0
          %390 = vmatpush1.msra.mxu0 0.0
          %391 = vmatprep.subr.mxu0 0.0
          %392 = vmatpush1.msra.mxu0 0.0
          %393 = vmatprep.subr.mxu0 0.0
          %394 = vmatpush1.msra.mxu0 0.0
          %395 = vmatprep.subr.mxu0 0.0
          %396 = vmatpush1.msra.mxu0 0.0
          %397 = vmatprep.subr.mxu0 0.0
          %398 = vmatpush1.msra.mxu0 0.0
          %399 = vmatprep.subr.mxu0 0.0
          %400 = vmatpush1.msra.mxu0 0.0
          %401 = vmatprep.subr.mxu0 0.0
          %402 = vmatpush1.msra.mxu0 0.0
          %403 = vmatprep.subr.mxu0 0.0
          %404 = vmatpush1.msra.mxu0 0.0
          %405 = vmatprep.subr.mxu0 0.0
          %406 = vmatpush1.msra.mxu0 0.0
          %407 = vmatprep.subr.mxu0 0.0
          %408 = vmatpush1.msra.mxu0 0.0
          %409 = vmatprep.subr.mxu0 0.0
          %410 = vmatpush1.msra.mxu0 0.0
          %411 = vmatprep.subr.mxu0 0.0
          %412 = vmatpush1.msra.mxu0 0.0
          %413 = vmatprep.subr.mxu0 0.0
          %414 = vmatpush1.msra.mxu0 0.0
          %415 = vmatprep.subr.mxu0 0.0
          %416 = vmatpush1.msra.mxu0 0.0
          %417 = vmatprep.subr.mxu0 0.0
          %418 = vmatpush1.msra.mxu0 0.0
          %419 = vmatprep.subr.mxu0 0.0
          %420 = vmatpush1.msra.mxu0 0.0
          %421 = vmatprep.subr.mxu0 0.0
          %422 = vmatpush1.msra.mxu0 0.0
          %423 = vmatprep.subr.mxu0 0.0
          %424 = vmatpush1.msra.mxu0 0.0
          %425 = vmatprep.subr.mxu0 0.0
          %426 = vmatpush1.msra.mxu0 0.0
          %427 = vmatprep.subr.mxu0 0.0
          %428 = vmatpush1.msra.mxu0 0.0
          %429 = vmatprep.subr.mxu0 0.0
          %430 = vmatpush1.msra.mxu0 0.0
          %431 = vmatprep.subr.mxu0 0.0
          %432 = vmatpush1.msra.mxu0 0.0
          %433 = vmatprep.subr.mxu0 0.0
          %434 = vmatpush1.msra.mxu0 0.0
          %435 = vmatprep.subr.mxu0 0.0
          %436 = vmatpush1.msra.mxu0 0.0
          %437 = vmatprep.mubr.f32.mxu0 0.0
          %438 = vmatmul.mubr.f32.gmra.mrb[0].mxu0 %v367
          %v439 = vpop.f32.mrb[0].mxu0
          %v440 = vadd.f32 %v364, %v439
          %v441 = vpop.f32.mrb[0].mxu0
          %442 = vdwg.mxu0
          %v443 = vmul.f32 %v440, 0.5
          %v444 = vtanh.pop %v443
          %vm445 = vcmask 24576
          %446 = vst.msk [vmem:[%s255] sm:$0x1] %vm445, %v444
        $region52: #{tpu_custom_call.1} parent=39 // pred_fallthru
          _
        %s447 = sand.u32 %s154, 1
        %s448 = scalar_lea.sflag [#allocation5], %s447
        %s449 = sand.u32 %s154, 1
        %s450 = scalar_lea.vmem [#allocation6], %s449
        // Predicated region
        $region53: #{tpu_custom_call.1} parent=39 // pred_check
          %p451 = pneg %p164
        $region54: #{tpu_custom_call.1} parent=39 // pred_check_branch
          %453 = sbr.rel (%p451) target = $region56
        $region55: #{tpu_custom_call.1} parent=39 // pred_region
          %s455 = ssub.s32 16, 16
          %456 = vsyncadd %s448, %s455
          %s457 = smul.addr %s26, 16
          %s458 = scalar_lea.hbm %s5, %s457
          %s460 = sshll.u32 %s450, 4
          %s461 = int_to_ptr.vmem [resolvable:$true] %s460
          %463 = dma.vmem_to_hbm [thread:$0]  %s461, 16, %s458, %s448
        $region56: #{tpu_custom_call.1} parent=39 // pred_fallthru
          _
      $region40: #{tpu_custom_call.1} parent=5 // pred_fallthru
        _
      %p464 = scmp.le.s32.totalorder 2, %s17
      // Predicated region
      $region57: #{tpu_custom_call.1} parent=5 // pred_check
        %p465 = pneg %p464
      $region58: #{tpu_custom_call.1} parent=5 // pred_check_branch
        %467 = sbr.rel (%p465) target = $region60
      $region59: #{tpu_custom_call.1} parent=5 // pred_region
        %s468 = ssub.s32 %s17, 2
        // Predicated region
        $region61: #{tpu_custom_call.1} parent=59 // pred_check
          %p469 = pneg %p170
        $region62: #{tpu_custom_call.1} parent=59 // pred_check_branch
          %471 = sbr.rel (%p469) target = $region64
        $region63: #{tpu_custom_call.1} parent=59 // pred_region
          %s472 = sand.u32 %s155, 1
          %s473 = scalar_lea.sflag [#allocation5], %s472
          %s474 = sand.u32 %s155, 1
          %s475 = scalar_lea.vmem [#allocation6], %s474
          %476 = dma.done %s473, 16
        $region64: #{tpu_custom_call.1} parent=59 // pred_fallthru
          _
      $region60: #{tpu_custom_call.1} parent=5 // pred_fallthru
        _
    $region6: #{tpu_custom_call.1} parent=1 // loop_footer
      %s21 = sadd.s32 1, %s17
    $region7: #{tpu_custom_call.1} parent=1 // loop_footer_branch
      %16 = sbr.rel target = $region3
    $region8: #{tpu_custom_call.1} parent=1 // loop_exit
      _
    %477 = vsyncpa [#allocation4], 1
    %s478 = scalar_lea.sflag [#allocation4], 1
    %479 = vsyncpa %s478, 1
    %480 = vsyncpa [#allocation5], 1
    %s481 = scalar_lea.sflag [#allocation5], 1
    %482 = vsyncpa %s481, 1

</llo_original>
